<compile_context>
chip_gen: v6e
topology: v6e:2x2x1
jax: 0.10.0
libtpu: 0.0.40
codegen_flags: <defaults>
</compile_context>

<pallas_src>
import functools

import jax
import jax.numpy as jnp
from jax import lax
from jax.experimental import pallas as pl
from jax.experimental.pallas import tpu as pltpu


def _round_up(v: int, m: int) -> int:
    return ((v + m - 1) // m) * m


def _vmem_budget_bytes() -> int:
    """Scoped-VMEM budget with ~25% headroom for compiler-internal scratch."""
    cap = 64 * 1024 * 1024  # safe fallback: assume the smallest generation (v7x)
    try:
        info = pltpu.get_tpu_info()
        cap = int(getattr(info, "vmem_capacity_bytes", cap))
    except Exception:
        pass
    return max(16 * 1024 * 1024, (cap * 3) // 4)


def _linear_attention_kernel(x_ref, w_ref, o_ref, *, p_orig):
    # x_ref : (Bt, L, Dp)   bf16 input tile (Bt batch elements per grid step)
    # w_ref : (Dp, 2*Pp)    bf16 fused [Wq | Wk] weights (resident, constant index_map)
    # o_ref : (Bt, L, Dp)   output tile (original x dtype, f32 here)
    Bt, L, Dp = x_ref.shape
    Pp = w_ref.shape[1] // 2

    x_bf = x_ref[...]                         # (Bt, L, Dp) bf16
    x2 = x_bf.reshape(Bt * L, Dp)             # present a tall M to the MXU

    # Fused projection (single MXU pass, f32 accumulation) + exp in f32
    # (accuracy; v5e has no bf16 VPU/EUP).
    qk = jnp.exp(jnp.dot(x2, w_ref[...], preferred_element_type=jnp.float32))
    q_prime = qk[:, :Pp]                      # lane-aligned static slices (free)
    k_prime = qk[:, Pp:]

    # Padded q' columns hold exp(0) = 1; zero them with a (1, Pp) broadcast
    # multiply.  With q' masked, the padded kv rows can never reach `num`
    # (regardless of k' padding) and the z row-sum is exact -> no correction.
    if Pp != p_orig:
        pmask = (lax.broadcasted_iota(jnp.int32, (1, Pp), 1) < p_orig)
        q_prime = q_prime * pmask.astype(jnp.float32)

    # z = 1 / (sum_p q' + 1e-8)  -> EUP approximate reciprocal (free slot).
    z = pl.reciprocal(jnp.sum(q_prime, axis=-1, keepdims=True) + 1e-8,
                      approx=True)            # (Bt*L, 1) f32

    # bf16 operands for the two chained matmuls; f32 accumulation on the MXU.
    q_bf = q_prime.astype(jnp.bfloat16)
    k_bf = k_prime.astype(jnp.bfloat16)

    # Per-batch-element contractions.  Static unroll; the wrapper keeps Bt
    # small (VMEM-budget heuristic) so live ranges stay bounded.
    for b in range(Bt):
        lo = b * L
        kb = k_bf[lo:lo + L]                  # (L, Pp) bf16
        xb = x2[lo:lo + L]                    # (L, Dp) bf16
        qb = q_bf[lo:lo + L]                  # (L, Pp) bf16
        zb = z[lo:lo + L]                     # (L, 1)  f32

        # kv = k'^T @ x without materializing a transpose: contract dim 0.
        kv = lax.dot_general(
            kb, xb,
            dimension_numbers=(((0,), (0,)), ((), ())),
            preferred_element_type=jnp.float32)            # (Pp, Dp) f32

        num = jnp.dot(qb, kv.astype(jnp.bfloat16),
                      preferred_element_type=jnp.float32)  # (L, Dp) f32

        o_ref[b] = (num * zb).astype(o_ref.dtype)


@functools.partial(jax.jit, static_argnames=("block_b",))
def linear_attention(x, q_proj, k_proj, *, block_b=None):
    """Pallas implementation of LinearAttention.forward.

    x      : (B, L, D) float32
    q_proj : (D, P)    float32
    k_proj : (D, P)    float32
    returns: (B, L, D) x.dtype
    """
    B, L, D = x.shape
    Dw, P = q_proj.shape
    assert D == Dw

    LANE = 128
    Dp = _round_up(D, LANE)
    Pp = _round_up(P, LANE)

    # ---- per-step VMEM byte model (conservative; includes bf16 copies) ----
    per_b = (
        2 * 2 * L * Dp            # bf16 x tile, double-buffered
        + 2 * 4 * L * Dp          # out tile (f32), double-buffered
        + 4 * L * 2 * Pp          # f32 qk = exp(x @ [Wq|Wk])
        + 2 * L * 2 * Pp          # bf16 q', k'
        + (4 + 2) * Pp * Dp       # f32 kv + bf16 kv (worst-case co-live per b)
        + 4 * L * Dp              # f32 num
    )
    fixed = 2 * 2 * Dp * 2 * Pp + (2 << 20)   # resident bf16 weights (2 bufs) + slack

    budget = _vmem_budget_bytes()
    max_bb = max(1, (budget - fixed) // per_b)

    if block_b is None:
        # Target >=4 grid steps (pipeline depth + both TensorCores on v7x /
        # megacore get balanced work); never below 1 batch element per step.
        target_steps = 4 if B >= 4 else max(1, B)
        block_b = -(-B // target_steps)
    block_b = int(max(1, min(block_b, max_bb, B)))

    Bp = _round_up(B, block_b)
    n_b = Bp // block_b

    per_step = fixed + block_b * per_b
    vmem_limit = int(min(budget, max(32 * 1024 * 1024, (per_step * 5) // 4)))

    # ---- lane-dense, bf16 HBM operands (pad + cast once in the wrapper) ----
    x_p = jnp.pad(x, ((0, Bp - B), (0, 0), (0, Dp - D))).astype(jnp.bfloat16)
    w_fused = jnp.zeros((Dp, 2 * Pp), dtype=jnp.bfloat16)
    w_fused = w_fused.at[:D, :P].set(q_proj.astype(jnp.bfloat16))
    w_fused = w_fused.at[:D, Pp:Pp + P].set(k_proj.astype(jnp.bfloat16))

    kernel = functools.partial(_linear_attention_kernel, p_orig=P)

    out_p = pl.pallas_call(
        kernel,
        out_shape=jax.ShapeDtypeStruct((Bp, L, Dp), x.dtype),
        grid_spec=pltpu.PrefetchScalarGridSpec(
            num_scalar_prefetch=0,
            grid=(n_b,),
            in_specs=[
                pl.BlockSpec((block_b, L, Dp), lambda b: (b, 0, 0)),  # x slab
                pl.BlockSpec((Dp, 2 * Pp), lambda b: (0, 0)),         # [Wq|Wk] resident
            ],
            out_specs=pl.BlockSpec((block_b, L, Dp), lambda b: (b, 0, 0)),
        ),
        compiler_params=pltpu.CompilerParams(
            dimension_semantics=("parallel",),
            vmem_limit_bytes=vmem_limit,
        ),
        cost_estimate=pl.CostEstimate(
            flops=8 * Bp * L * Dp * Pp,
            transcendentals=2 * Bp * L * Pp,
            bytes_accessed=6 * Bp * L * Dp + 4 * Dp * Pp,
        ),
    )(x_p, w_fused)

    # Slice off batch / feature padding.
    return out_p[:B, :, :D]


def linear_attention_ref(x, q_proj, k_proj):
    """Pure-JAX reference mirroring the PyTorch module exactly (f32)."""
    q_prime = jnp.exp(jnp.einsum("bld,de->ble", x, q_proj))
    k_prime = jnp.exp(jnp.einsum("bld,de->ble", x, k_proj))
    kv = jnp.einsum("ble,bld->bed", k_prime, x)
    num = jnp.einsum("blp,bpd->bld", q_prime, kv)
    z = 1.0 / (jnp.sum(q_prime, axis=-1, keepdims=True) + 1e-8)
    return num * z


if __name__ == "__main__":
    # Small shapes consistent with the module: B=2, L=16, D=32, proj_dim=64.
    B, L, D, P = 2, 16, 32, 64

    key = jax.random.PRNGKey(0)
    kx, kq, kk = jax.random.split(key, 3)

    # Deterministic parameter init matching nn.Parameter(randn(D, P) / P**0.5).
    q_proj = jax.random.normal(kq, (D, P), dtype=jnp.float32) / (P ** 0.5)
    k_proj = jax.random.normal(kk, (D, P), dtype=jnp.float32) / (P ** 0.5)

    # Keep inputs modest so exp() stays well-conditioned.
    x = 0.1 * jax.random.normal(kx, (B, L, D), dtype=jnp.float32)

    out = linear_attention(x, q_proj, k_proj)
    out = jax.block_until_ready(out)

    ref = linear_attention_ref(x, q_proj, k_proj)
    assert out.shape == (B, L, D)
    # bf16 HBM stream + bf16 MXU operands + approx reciprocal => ~1% relative
    # error vs the f32 reference; tolerance sized accordingly.
    assert jnp.allclose(out, ref, rtol=3e-2, atol=5e-3), "mismatch vs reference"

    print("KERNEL_OK")
</pallas_src>

<mosaic_0001>
module attributes {stable_mosaic.version = 11 : i64} {
  func.func @_linear_attention_kernel(%arg0: i32, %arg1: memref<1x16x128xbf16, #tpu.memory_space<vmem>>, %arg2: memref<128x256xbf16, #tpu.memory_space<vmem>>, %arg3: memref<1x16x128xf32, #tpu.memory_space<vmem>>) attributes {dimension_semantics = [#tpu.dimension_semantics<parallel>], iteration_bounds = array<i64: 2>, scalar_prefetch = 0 : i64, scratch_operands = 0 : i64, tpu.core_type = #tpu.core_type<tc>, window_params = [{transform_indices = @transform_0, window_bounds = array<i64: 1, 16, 128>}, {pipeline_mode = #tpu.pipeline_mode<synchronous>, transform_indices = @transform_1, window_bounds = array<i64: 128, 256>}, {transform_indices = @transform_2, window_bounds = array<i64: 1, 16, 128>}]} {
    %c0 = arith.constant 0 : index
    %c0_0 = arith.constant 0 : index
    %c0_1 = arith.constant 0 : index
    %0 = vector.load %arg1[%c0, %c0_0, %c0_1] : memref<1x16x128xbf16, #tpu.memory_space<vmem>>, vector<1x16x128xbf16>
    %1 = vector.shape_cast %0 : vector<1x16x128xbf16> to vector<16x128xbf16>
    %c0_2 = arith.constant 0 : index
    %c0_3 = arith.constant 0 : index
    %2 = vector.load %arg2[%c0_2, %c0_3] : memref<128x256xbf16, #tpu.memory_space<vmem>>, vector<128x256xbf16>
    %cst = arith.constant dense<0.000000e+00> : vector<16x256xf32>
    %3 = tpu.matmul %1, %2, %cst {dimension_numbers = #tpu.dot_dimension_numbers<[1], [0], [0], [1], [0, 0, 1, 1], [], []>} : vector<16x128xbf16>, vector<128x256xbf16>, vector<16x256xf32> -> vector<16x256xf32>
    %4 = math.exp %3 : vector<16x256xf32>
    %5 = vector.extract_strided_slice %4 {offsets = [0, 0], sizes = [16, 128], strides = [1, 1]} : vector<16x256xf32> to vector<16x128xf32>
    %6 = vector.extract_strided_slice %4 {offsets = [0, 128], sizes = [16, 128], strides = [1, 1]} : vector<16x256xf32> to vector<16x128xf32>
    %7 = tpu.iota {dimensions = array<i32: 1>} : vector<1x128xi32>
    %c64_i32 = arith.constant 64 : i32
    %8 = vector.broadcast %c64_i32 : i32 to vector<1x128xi32>
    %9 = arith.cmpi slt, %7, %8 : vector<1x128xi32>
    %10 = arith.extui %9 : vector<1x128xi1> to vector<1x128xi32>
    %11 = arith.sitofp %10 : vector<1x128xi32> to vector<1x128xf32>
    %12 = vector.broadcast %11 : vector<1x128xf32> to vector<16x128xf32>
    %13 = arith.mulf %5, %12 : vector<16x128xf32>
    %cst_4 = arith.constant dense<0.000000e+00> : vector<16xf32>
    %14 = vector.multi_reduction <add>, %13, %cst_4 [1] : vector<16x128xf32> to vector<16xf32>
    %15 = vector.shape_cast %14 : vector<16xf32> to vector<16x1xf32>
    %cst_5 = arith.constant 9.99999993E-9 : f32
    %16 = vector.broadcast %cst_5 : f32 to vector<16x1xf32>
    %17 = arith.addf %15, %16 : vector<16x1xf32>
    %18 = tpu.reciprocal %17 {approx = true} : vector<16x1xf32> -> vector<16x1xf32>
    %19 = arith.truncf %13 : vector<16x128xf32> to vector<16x128xbf16>
    %20 = arith.truncf %6 : vector<16x128xf32> to vector<16x128xbf16>
    %cst_6 = arith.constant dense<0.000000e+00> : vector<128x128xf32>
    %21 = tpu.matmul %20, %1, %cst_6 {dimension_numbers = #tpu.dot_dimension_numbers<[0], [0], [1], [1], [0, 1, 1, 1], [], []>} : vector<16x128xbf16>, vector<16x128xbf16>, vector<128x128xf32> -> vector<128x128xf32>
    %22 = arith.truncf %21 : vector<128x128xf32> to vector<128x128xbf16>
    %cst_7 = arith.constant dense<0.000000e+00> : vector<16x128xf32>
    %23 = tpu.matmul %19, %22, %cst_7 {dimension_numbers = #tpu.dot_dimension_numbers<[1], [0], [0], [1], [0, 0, 1, 1], [], []>} : vector<16x128xbf16>, vector<128x128xbf16>, vector<16x128xf32> -> vector<16x128xf32>
    %24 = vector.broadcast %18 : vector<16x1xf32> to vector<16x128xf32>
    %25 = arith.mulf %23, %24 : vector<16x128xf32>
    %c0_8 = arith.constant 0 : index
    %c0_9 = arith.constant 0 : index
    %c0_10 = arith.constant 0 : index
    %26 = vector.load %arg3[%c0_8, %c0_9, %c0_10] : memref<1x16x128xf32, #tpu.memory_space<vmem>>, vector<1x16x128xf32>
    %27 = vector.shape_cast %26 : vector<1x16x128xf32> to vector<16x128xf32>
    %28 = vector.shape_cast %25 : vector<16x128xf32> to vector<1x16x128xf32>
    tpu.vector_store %arg3[%c0_8, %c0_9, %c0_10], %28 {strides = array<i32>} : memref<1x16x128xf32, #tpu.memory_space<vmem>>, vector<1x16x128xf32>,
    return
  }
  func.func @transform_0(%arg0: i32) -> (i32, i32, i32) {
    %c0_i32 = arith.constant 0 : i32
    %c0_i32_0 = arith.constant 0 : i32
    %c0_i32_1 = arith.constant 0 : i32
    return %arg0, %c0_i32, %c0_i32_0 : i32, i32, i32
  }
  func.func @transform_1(%arg0: i32) -> (i32, i32) {
    %c0_i32 = arith.constant 0 : i32
    %c0_i32_0 = arith.constant 0 : i32
    %c0_i32_1 = arith.constant 0 : i32
    return %c0_i32, %c0_i32_0 : i32, i32
  }
  func.func @transform_2(%arg0: i32) -> (i32, i32, i32) {
    %c0_i32 = arith.constant 0 : i32
    %c0_i32_0 = arith.constant 0 : i32
    %c0_i32_1 = arith.constant 0 : i32
    return %arg0, %c0_i32, %c0_i32_0 : i32, i32, i32
  }
}

</mosaic_0001>

<llo_original>
// kernel: linear_attention.1
$region0: #{linear_attention.1}
  #allocation0 [shape = 'u32[]', space=smem, size = 0x4, offset = 0x4, fixed_abs, tag = 'smem constant byte address 0x4 - core index']
  #allocation1 [shape = 'u32[144,128]{1,0:T(1,128)}', space=vmem, size = 0x12000, scoped, tag = 'internal scratch']
  %s0 = inlined_call_operand.vmem [shape: bf16[2,16,128], index: 0, kind: input, shape index: {}]
  %s1 = inlined_call_operand.vmem [shape: bf16[128,256], index: 1, kind: input, shape index: {}]
  %s2 = inlined_call_operand.hbm [shape: f32[2,16,128], index: 2, kind: output, shape index: {}]
  %s3 = sld [smem:[#allocation0]]
  $region41: #{linear_attention.1} parent=0
    _
  %s5 = ssub.s32 1, %s3
  %s6 = scalar_select 0, %s5, %s3
  $region1: #{linear_attention.1} parent=0
    #allocation2 [shape = 'u8[16384]{0}', space=vmem, size = 0x4000, scoped, tag = 'output window, operand 0']
    #allocation3 [shape = 's32[2]{0}', space=sflag, size = 0x8, scoped, tag = 'scoped memory for linear_attention.1']
    %7 = vsyncpa [#allocation3], 0
    %s8 = scalar_lea.sflag [#allocation3], 1
    %9 = vsyncpa %s8, 0
    loop: start=0, step=1, limit=4
    $region2: #{linear_attention.1} parent=1 // loop_pre_header
      _
    $region3: #{linear_attention.1} parent=1 // loop_header
      %s11 = sphi 0, %s15
      %p12 = scmp.ge.s32.totalorder %s11, 4
      %s21 = sphi 0, %s23
      %s24 = sphi 0, %s21
      %s25 = sphi 0, %s24
      %s41 = sphi 0, %s25
      %s45 = sphi 0, %s45
      %s47 = sphi 0, %s45
      %s48 = sphi 0, %s47
      %s62 = sphi 0, %s48
      %s68 = sphi 0, %s70
      %s71 = sphi 0, %s68
      %s72 = sphi 0, %s71
      %s88 = sphi 0, %s72
    $region4: #{linear_attention.1} parent=1 // loop_header_branch
      %14 = sbr.rel (%p12) target = $region8
    $region5: #{linear_attention.1} parent=1 // loop_body
      %s16 = ssub.s32 %s11, 1
      %s17 = ssub.s32 %s11, 2
      %s18 = sadd.s32 %s11, 1
      %s19 = ssub.s32 %s11, %s18
      %p20 = scmp.eq.s32.totalorder %s19, 0
      %s22 = sadd.s32 %s21, 1
      %s23 = scalar_select %p20, %s21, %s22
      %p26 = pneg %p20
      %p27 = scmp.eq.s32.totalorder %s11, 1
      %p28 = por %p26, %p27
      %p29 = scmp.ne.s32.totalorder %s21, %s24
      %p30 = scmp.eq.s32.totalorder %s11, 0
      %p31 = por %p29, %p30
      %p32 = scmp.ne.s32.totalorder %s21, %s24
      %p33 = scmp.eq.s32.totalorder %s16, 1
      %p34 = por %p32, %p33
      %p35 = scmp.ne.s32.totalorder %s24, %s25
      %p36 = scmp.eq.s32.totalorder %s16, 0
      %p37 = por %p35, %p36
      %p38 = scmp.ne.s32.totalorder %s24, %s25
      %p39 = scmp.eq.s32.totalorder %s17, 1
      %p40 = por %p38, %p39
      %p42 = scmp.ne.s32.totalorder %s25, %s41
      %p43 = scmp.eq.s32.totalorder %s17, 0
      %p44 = por %p42, %p43
      %s46 = sadd.s32 %s45, 1
      %p49 = scmp.eq.s32.totalorder %s11, 1
      %p50 = scmp.ne.s32.totalorder %s45, %s47
      %p51 = scmp.eq.s32.totalorder %s11, 0
      %p52 = por %p50, %p51
      %p53 = scmp.ne.s32.totalorder %s45, %s47
      %p54 = scmp.eq.s32.totalorder %s16, 1
      %p55 = por %p53, %p54
      %p56 = scmp.ne.s32.totalorder %s47, %s48
      %p57 = scmp.eq.s32.totalorder %s16, 0
      %p58 = por %p56, %p57
      %p59 = scmp.ne.s32.totalorder %s47, %s48
      %p60 = scmp.eq.s32.totalorder %s17, 1
      %p61 = por %p59, %p60
      %p63 = scmp.ne.s32.totalorder %s48, %s62
      %p64 = scmp.eq.s32.totalorder %s17, 0
      %p65 = por %p63, %p64
      %s66 = ssub.s32 %s11, %s18
      %p67 = scmp.eq.s32.totalorder %s66, 0
      %s69 = sadd.s32 %s68, 1
      %s70 = scalar_select %p67, %s68, %s69
      %p73 = pneg %p67
      %p74 = scmp.eq.s32.totalorder %s11, 1
      %p75 = por %p73, %p74
      %p76 = scmp.ne.s32.totalorder %s68, %s71
      %p77 = scmp.eq.s32.totalorder %s11, 0
      %p78 = por %p76, %p77
      %p79 = scmp.ne.s32.totalorder %s68, %s71
      %p80 = scmp.eq.s32.totalorder %s16, 1
      %p81 = por %p79, %p80
      %p82 = scmp.ne.s32.totalorder %s71, %s72
      %p83 = scmp.eq.s32.totalorder %s16, 0
      %p84 = por %p82, %p83
      %p85 = scmp.ne.s32.totalorder %s71, %s72
      %p86 = scmp.eq.s32.totalorder %s17, 1
      %p87 = por %p85, %p86
      %p89 = scmp.ne.s32.totalorder %s72, %s88
      %p90 = scmp.eq.s32.totalorder %s17, 0
      %p91 = por %p89, %p90
      %p92 = scmp.le.s32.totalorder 1, %s11
      %p93 = scmp.lt.s32.totalorder %s11, 3
      %p94 = pnand %p92, %p93
      %p95 = pneg %p94
      // Predicated region
      $region9: #{linear_attention.1} parent=5 // pred_check
        _
      $region10: #{linear_attention.1} parent=5 // pred_check_branch
        %97 = sbr.rel (%p94) target = $region12
      $region11: #{linear_attention.1} parent=5 // pred_region
        %s98 = ssub.s32 %s11, 1
        // Predicated region
        $region13: #{linear_attention.1} parent=11 // pred_check
          %p99 = pneg %p58
        $region14: #{linear_attention.1} parent=11 // pred_check_branch
          %101 = sbr.rel (%p99) target = $region16
        $region15: #{linear_attention.1} parent=11 // pred_region
          _
        $region16: #{linear_attention.1} parent=11 // pred_fallthru
          _
      $region12: #{linear_attention.1} parent=5 // pred_fallthru
        _
      %p102 = scmp.lt.s32.totalorder %s11, 2
      // Predicated region
      $region17: #{linear_attention.1} parent=5 // pred_check
        %p103 = pneg %p102
      $region18: #{linear_attention.1} parent=5 // pred_check_branch
        %105 = sbr.rel (%p103) target = $region20
      $region19: #{linear_attention.1} parent=5 // pred_region
        // Predicated region
        $region21: #{linear_attention.1} parent=19 // pred_check
          %p106 = pneg %p31
        $region22: #{linear_attention.1} parent=19 // pred_check_branch
          %108 = sbr.rel (%p106) target = $region24
        $region23: #{linear_attention.1} parent=19 // pred_region
          %p109 = scmp.lt.s32.totalorder %s11, 1
          %s110 = scalar_select %p109, %s11, 1
          %s111 = smul.addr %s110, 2
          %s112 = smul.addr %s111, 4
          %s113 = scalar_lea.vmem %s0, %s112
        $region24: #{linear_attention.1} parent=19 // pred_fallthru
          _
      $region20: #{linear_attention.1} parent=5 // pred_fallthru
        _
      %p114 = scmp.le.s32.totalorder 1, %s11
      %p115 = scmp.lt.s32.totalorder %s11, 3
      %p116 = pnand %p114, %p115
      %p117 = pneg %p116
      // Predicated region
      $region25: #{linear_attention.1} parent=5 // pred_check
        _
      $region26: #{linear_attention.1} parent=5 // pred_check_branch
        %119 = sbr.rel (%p116) target = $region28
      $region27: #{linear_attention.1} parent=5 // pred_region
        %s120 = ssub.s32 %s11, 1
        %p121 = scmp.lt.s32.totalorder %s16, 1
        %s122 = scalar_select %p121, %s16, 1
        %s123 = smul.addr %s122, 2
        %s124 = smul.addr %s123, 4
        %s125 = scalar_lea.vmem %s0, %s124
        %p126 = pneg %p37
        %p127 = pneg %p34
        %p128 = pneg %p58
        %p129 = pneg %p55
        %p130 = pneg %p84
        %p131 = pneg %p81
        %s132 = sand.u32 %s71, 1
        %s133 = scalar_lea.sflag [#allocation3], %s132
        %s134 = sand.u32 %s71, 1
        %s135 = smul.addr %s134, 16
        %s136 = scalar_lea.vmem [#allocation2], %s135
        %p137 = scmp.lt.s32.totalorder %s16, 1
        %s138 = scalar_select %p137, %s16, 1
        %s139 = smul.addr %s138, 2
        %s140 = smul.addr %s139, 4
        %s141 = scalar_lea.vmem %s0, %s140
        %v143 = vld [vmem:[%s141] sm:$0xf]
        %v144 = vld [vmem:[%s141 + $0x4] sm:$0xf]
        %v145 = vld [vmem:[%s1] sm:$0xff]
        %v146 = vld [vmem:[%s1 + $0x8] sm:$0xff]
        %v147 = vld [vmem:[%s1 + $0x10] sm:$0xff]
        %v148 = vld [vmem:[%s1 + $0x18] sm:$0xff]
        %v149 = vld [vmem:[%s1 + $0x20] sm:$0xff]
        %v150 = vld [vmem:[%s1 + $0x28] sm:$0xff]
        %v151 = vld [vmem:[%s1 + $0x30] sm:$0xff]
        %v152 = vld [vmem:[%s1 + $0x38] sm:$0xff]
        %v153 = vld [vmem:[%s1 + $0x40] sm:$0xff]
        %v154 = vld [vmem:[%s1 + $0x48] sm:$0xff]
        %v155 = vld [vmem:[%s1 + $0x50] sm:$0xff]
        %v156 = vld [vmem:[%s1 + $0x58] sm:$0xff]
        %v157 = vld [vmem:[%s1 + $0x60] sm:$0xff]
        %v158 = vld [vmem:[%s1 + $0x68] sm:$0xff]
        %v159 = vld [vmem:[%s1 + $0x70] sm:$0xff]
        %v160 = vld [vmem:[%s1 + $0x78] sm:$0xff]
        %v163 = vunpack.c.l.b16 %v143
        %v164 = vunpack.c.l.b16 %v144
        %v165 = vpack.c.b16 %v164, %v163
        %v183 = vunpack.c.l.b16 %v145
        %v184 = vunpack.c.h.b16 %v145
        %v185 = vunpack.c.l.b16 %v146
        %v186 = vunpack.c.h.b16 %v146
        %v187 = vunpack.c.l.b16 %v147
        %v188 = vunpack.c.h.b16 %v147
        %v189 = vunpack.c.l.b16 %v148
        %v190 = vunpack.c.h.b16 %v148
        %v191 = vunpack.c.l.b16 %v149
        %v192 = vunpack.c.h.b16 %v149
        %v193 = vunpack.c.l.b16 %v150
        %v194 = vunpack.c.h.b16 %v150
        %v195 = vunpack.c.l.b16 %v151
        %v196 = vunpack.c.h.b16 %v151
        %v197 = vunpack.c.l.b16 %v152
        %v198 = vunpack.c.h.b16 %v152
        %v199 = vunpack.c.l.b16 %v153
        %v200 = vunpack.c.h.b16 %v153
        %v201 = vunpack.c.l.b16 %v154
        %v202 = vunpack.c.h.b16 %v154
        %v203 = vunpack.c.l.b16 %v155
        %v204 = vunpack.c.h.b16 %v155
        %v205 = vunpack.c.l.b16 %v156
        %v206 = vunpack.c.h.b16 %v156
        %v207 = vunpack.c.l.b16 %v157
        %v208 = vunpack.c.h.b16 %v157
        %v209 = vunpack.c.l.b16 %v158
        %v210 = vunpack.c.h.b16 %v158
        %v211 = vunpack.c.l.b16 %v159
        %v212 = vunpack.c.h.b16 %v159
        %v213 = vunpack.c.l.b16 %v160
        %v214 = vunpack.c.h.b16 %v160
        %v215 = vpack.c.b16 %v185, %v183
        %v216 = vpack.c.b16 %v186, %v184
        %v217 = vpack.c.b16 %v189, %v187
        %v218 = vpack.c.b16 %v190, %v188
        %v219 = vpack.c.b16 %v193, %v191
        %v220 = vpack.c.b16 %v194, %v192
        %v221 = vpack.c.b16 %v197, %v195
        %v222 = vpack.c.b16 %v198, %v196
        %v223 = vpack.c.b16 %v201, %v199
        %v224 = vpack.c.b16 %v202, %v200
        %v225 = vpack.c.b16 %v205, %v203
        %v226 = vpack.c.b16 %v206, %v204
        %v227 = vpack.c.b16 %v209, %v207
        %v228 = vpack.c.b16 %v210, %v208
        %v229 = vpack.c.b16 %v213, %v211
        %v230 = vpack.c.b16 %v214, %v212
        %247 = vmatprep.subr.bf16.mxu0 %v230
        %248 = vmatpush1.bf16.msra.mxu0 %v229
        %249 = vmatprep.subr.bf16.mxu0 %v228
        %250 = vmatpush1.bf16.msra.mxu0 %v227
        %251 = vmatprep.subr.bf16.mxu0 %v226
        %252 = vmatpush1.bf16.msra.mxu0 %v225
        %253 = vmatprep.subr.bf16.mxu0 %v224
        %254 = vmatpush1.bf16.msra.mxu0 %v223
        %255 = vmatprep.subr.bf16.mxu0 %v222
        %256 = vmatpush1.bf16.msra.mxu0 %v221
        %257 = vmatprep.subr.bf16.mxu0 %v220
        %258 = vmatpush1.bf16.msra.mxu0 %v219
        %259 = vmatprep.subr.bf16.mxu0 %v218
        %260 = vmatpush1.bf16.msra.mxu0 %v217
        %261 = vmatprep.subr.bf16.mxu0 %v216
        %262 = vmatpush1.bf16.msra.mxu0 %v215
        %263 = vmatprep.subr.bf16.mxu0 0
        %264 = vmatpush2.bf16.msra.mxu0 0
        %265 = vmatprep.subr.bf16.mxu0 0
        %266 = vmatpush2.bf16.msra.mxu0 0
        %267 = vmatprep.subr.bf16.mxu0 0
        %268 = vmatpush2.bf16.msra.mxu0 0
        %269 = vmatprep.subr.bf16.mxu0 0
        %270 = vmatpush2.bf16.msra.mxu0 0
        %271 = vmatprep.subr.bf16.mxu0 0
        %272 = vmatpush2.bf16.msra.mxu0 0
        %273 = vmatprep.subr.bf16.mxu0 0
        %274 = vmatpush2.bf16.msra.mxu0 0
        %275 = vmatprep.subr.bf16.mxu0 0
        %276 = vmatpush2.bf16.msra.mxu0 0
        %277 = vmatprep.subr.bf16.mxu0 0
        %278 = vmatpush2.bf16.msra.mxu0 0
        %279 = vmatprep.mubr.bf16.mxu0 0
        %280 = vmatmul.mubr.bf16.gmra.mxu0 %v165
        %v281 = vpop.f32.mrf.mxu0
        %v282 = vadd.f32 0.0, %v281
        %v283 = vpop.f32.mrf.mxu0
        %v284 = vadd.f32 0.0, %v283
        %v285 = vpop.f32.mrf.mxu0
        %v286 = vadd.f32 0.0, %v285
        %v287 = vpop.f32.mrf.mxu0
        %v288 = vadd.f32 0.0, %v287
        %289 = vdwg.mxu0
        %v290 = vmul.f32 %v282, 1.442695
        %v291 = vpow.pop %v290
        %v292 = vmul.f32 %v284, 1.442695
        %v293 = vpow.pop %v292
        %v294 = vmul.f32 %v286, 1.442695
        %v295 = vpow.pop %v294
        %v296 = vmul.f32 %v288, 1.442695
        %v297 = vpow.pop %v296
        %v298 = vlaneseq
        %v299 = vand.u32 %v298, 127
        %vm300 = vcmp.lt.s32.totalorder %v299, 64
        %v301 = vsel %vm300, 1, 0
        %v302 = vcvt.s32.f32 %v301
        %v303 = vmul.f32 %v291, %v302
        %v304 = vmul.f32 %v295, %v302
        %305 = vadd.xlane.f32.xlu0 %v303
        %v306 = vpop.xlane.xlu0 %305
        %307 = vadd.xlane.f32.xlu0 %v304
        %v308 = vpop.xlane.xlu0 %307
        %v309 = vadd.f32 %v306, 1e-08
        %v310 = vadd.f32 %v308, 1e-08
        %v311 = vrcp.pop %v309
        %v312 = vrcp.pop %v310
        %v313 = vpack.c.bf16 %v304, %v303
        %v314 = vpack.c.bf16 %v297, %v293
        %315 = vxpose.xlu0.c.b16.start [1/8] %v314, 128
        %316 = vxpose.xlu0.c.b16.cont [2/8] 0, 128
        %317 = vxpose.xlu0.c.b16.cont [3/8] 0, 128
        %318 = vxpose.xlu0.c.b16.cont [4/8] 0, 128
        %319 = vxpose.xlu0.c.b16.cont [5/8] 0, 128
        %320 = vxpose.xlu0.c.b16.cont [6/8] 0, 128
        %321 = vxpose.xlu0.c.b16.cont [7/8] 0, 128
        %322 = vxpose.xlu0.c.b16.end [8/8] 0, 128
        %v323 = vpop.trf.xlu0
        %v324 = vpop.trf.xlu0
        %v325 = vpop.trf.xlu0
        %v326 = vpop.trf.xlu0
        %v327 = vpop.trf.xlu0
        %v328 = vpop.trf.xlu0
        %v329 = vpop.trf.xlu0
        %v330 = vpop.trf.xlu0
        %vm331 = vcmask 130048
        %v333 = vsel %vm331, %v323, 0
        %v336 = vsel %vm331, %v324, 0
        %v339 = vsel %vm331, %v325, 0
        %v342 = vsel %vm331, %v326, 0
        %v345 = vsel %vm331, %v327, 0
        %v348 = vsel %vm331, %v328, 0
        %v351 = vsel %vm331, %v329, 0
        %v354 = vsel %vm331, %v330, 0
        %356 = vmatprep.subr.bf16.mxu0 0
        %357 = vmatpush1.bf16.msra.mxu0 0
        %358 = vmatprep.subr.bf16.mxu0 0
        %359 = vmatpush1.bf16.msra.mxu0 0
        %360 = vmatprep.subr.bf16.mxu0 0
        %361 = vmatpush1.bf16.msra.mxu0 0
        %362 = vmatprep.subr.bf16.mxu0 0
        %363 = vmatpush1.bf16.msra.mxu0 0
        %364 = vmatprep.subr.bf16.mxu0 0
        %365 = vmatpush1.bf16.msra.mxu0 0
        %366 = vmatprep.subr.bf16.mxu0 0
        %367 = vmatpush1.bf16.msra.mxu0 0
        %368 = vmatprep.subr.bf16.mxu0 0
        %369 = vmatpush1.bf16.msra.mxu0 0
        %370 = vmatprep.subr.bf16.mxu0 0
        %371 = vmatpush1.bf16.msra.mxu0 %v165
        %372 = vmatprep.subr.bf16.mxu0 0
        %373 = vmatpush2.bf16.msra.mxu0 0
        %374 = vmatprep.subr.bf16.mxu0 0
        %375 = vmatpush2.bf16.msra.mxu0 0
        %376 = vmatprep.subr.bf16.mxu0 0
        %377 = vmatpush2.bf16.msra.mxu0 0
        %378 = vmatprep.subr.bf16.mxu0 0
        %379 = vmatpush2.bf16.msra.mxu0 0
        %380 = vmatprep.subr.bf16.mxu0 0
        %381 = vmatpush2.bf16.msra.mxu0 0
        %382 = vmatprep.subr.bf16.mxu0 0
        %383 = vmatpush2.bf16.msra.mxu0 0
        %384 = vmatprep.subr.bf16.mxu0 0
        %385 = vmatpush2.bf16.msra.mxu0 0
        %386 = vmatprep.subr.bf16.mxu0 0
        %387 = vmatpush2.bf16.msra.mxu0 0
        %388 = vmatprep.mubr.bf16.mxu0 0
        %389 = vmatmul.mubr.bf16.gmra.mxu0 %v333
        %v390 = vpop.f32.mrf.mxu0
        %v391 = vadd.f32 0.0, %v390
        %v392 = vpop.f32.mrf.mxu0
        %v393 = vpop.f32.mrf.mxu0
        %v394 = vadd.f32 0.0, %v393
        %v395 = vpop.f32.mrf.mxu0
        %396 = vmatprep.mubr.bf16.mxu0 0
        %397 = vmatmul.mubr.bf16.gmra.mxu0 %v336
        %v398 = vpop.f32.mrf.mxu0
        %v399 = vadd.f32 0.0, %v398
        %v400 = vpop.f32.mrf.mxu0
        %v401 = vpop.f32.mrf.mxu0
        %v402 = vadd.f32 0.0, %v401
        %v403 = vpop.f32.mrf.mxu0
        %404 = vmatprep.mubr.bf16.mxu0 0
        %405 = vmatmul.mubr.bf16.gmra.mxu0 %v339
        %v406 = vpop.f32.mrf.mxu0
        %v407 = vadd.f32 0.0, %v406
        %v408 = vpop.f32.mrf.mxu0
        %v409 = vpop.f32.mrf.mxu0
        %v410 = vadd.f32 0.0, %v409
        %v411 = vpop.f32.mrf.mxu0
        %412 = vmatprep.mubr.bf16.mxu0 0
        %413 = vmatmul.mubr.bf16.gmra.mxu0 %v342
        %v414 = vpop.f32.mrf.mxu0
        %v415 = vadd.f32 0.0, %v414
        %v416 = vpop.f32.mrf.mxu0
        %v417 = vpop.f32.mrf.mxu0
        %v418 = vadd.f32 0.0, %v417
        %v419 = vpop.f32.mrf.mxu0
        %420 = vmatprep.mubr.bf16.mxu0 0
        %421 = vmatmul.mubr.bf16.gmra.mxu0 %v345
        %v422 = vpop.f32.mrf.mxu0
        %v423 = vadd.f32 0.0, %v422
        %v424 = vpop.f32.mrf.mxu0
        %v425 = vpop.f32.mrf.mxu0
        %v426 = vadd.f32 0.0, %v425
        %v427 = vpop.f32.mrf.mxu0
        %428 = vmatprep.mubr.bf16.mxu0 0
        %429 = vmatmul.mubr.bf16.gmra.mxu0 %v348
        %v430 = vpop.f32.mrf.mxu0
        %v431 = vadd.f32 0.0, %v430
        %v432 = vpop.f32.mrf.mxu0
        %v433 = vpop.f32.mrf.mxu0
        %v434 = vadd.f32 0.0, %v433
        %v435 = vpop.f32.mrf.mxu0
        %436 = vmatprep.mubr.bf16.mxu0 0
        %437 = vmatmul.mubr.bf16.gmra.mxu0 %v351
        %v438 = vpop.f32.mrf.mxu0
        %v439 = vadd.f32 0.0, %v438
        %v440 = vpop.f32.mrf.mxu0
        %v441 = vpop.f32.mrf.mxu0
        %v442 = vadd.f32 0.0, %v441
        %v443 = vpop.f32.mrf.mxu0
        %444 = vmatprep.mubr.bf16.mxu0 0
        %445 = vmatmul.mubr.bf16.gmra.mxu0 %v354
        %v446 = vpop.f32.mrf.mxu0
        %v447 = vadd.f32 0.0, %v446
        %v448 = vpop.f32.mrf.mxu0
        %v449 = vpop.f32.mrf.mxu0
        %v450 = vadd.f32 0.0, %v449
        %v451 = vpop.f32.mrf.mxu0
        %452 = vdwg.mxu0
        %v453 = vpack.c.bf16 %v394, %v391
        %v454 = vpack.c.bf16 %v402, %v399
        %v455 = vpack.c.bf16 %v410, %v407
        %v456 = vpack.c.bf16 %v418, %v415
        %v457 = vpack.c.bf16 %v426, %v423
        %v458 = vpack.c.bf16 %v434, %v431
        %v459 = vpack.c.bf16 %v442, %v439
        %v460 = vpack.c.bf16 %v450, %v447
        %461 = vmatprep.subr.bf16.mxu0 0
        %462 = vmatpush1.bf16.msra.mxu0 %v460
        %463 = vmatprep.subr.bf16.mxu0 0
        %464 = vmatpush1.bf16.msra.mxu0 %v459
        %465 = vmatprep.subr.bf16.mxu0 0
        %466 = vmatpush1.bf16.msra.mxu0 %v458
        %467 = vmatprep.subr.bf16.mxu0 0
        %468 = vmatpush1.bf16.msra.mxu0 %v457
        %469 = vmatprep.subr.bf16.mxu0 0
        %470 = vmatpush1.bf16.msra.mxu0 %v456
        %471 = vmatprep.subr.bf16.mxu0 0
        %472 = vmatpush1.bf16.msra.mxu0 %v455
        %473 = vmatprep.subr.bf16.mxu0 0
        %474 = vmatpush1.bf16.msra.mxu0 %v454
        %475 = vmatprep.subr.bf16.mxu0 0
        %476 = vmatpush1.bf16.msra.mxu0 %v453
        %477 = vmatprep.subr.bf16.mxu0 0
        %478 = vmatpush2.bf16.msra.mxu0 0
        %479 = vmatprep.subr.bf16.mxu0 0
        %480 = vmatpush2.bf16.msra.mxu0 0
        %481 = vmatprep.subr.bf16.mxu0 0
        %482 = vmatpush2.bf16.msra.mxu0 0
        %483 = vmatprep.subr.bf16.mxu0 0
        %484 = vmatpush2.bf16.msra.mxu0 0
        %485 = vmatprep.subr.bf16.mxu0 0
        %486 = vmatpush2.bf16.msra.mxu0 0
        %487 = vmatprep.subr.bf16.mxu0 0
        %488 = vmatpush2.bf16.msra.mxu0 0
        %489 = vmatprep.subr.bf16.mxu0 0
        %490 = vmatpush2.bf16.msra.mxu0 0
        %491 = vmatprep.subr.bf16.mxu0 0
        %492 = vmatpush2.bf16.msra.mxu0 0
        %493 = vmatprep.mubr.bf16.mxu0 0
        %494 = vmatmul.mubr.bf16.gmra.mxu0 %v313
        %v495 = vpop.f32.mrf.mxu0
        %v496 = vadd.f32 0.0, %v495
        %v497 = vpop.f32.mrf.mxu0
        %v498 = vpop.f32.mrf.mxu0
        %v499 = vadd.f32 0.0, %v498
        %v500 = vpop.f32.mrf.mxu0
        %501 = vdwg.mxu0
        %v502 = vmul.f32 %v496, %v311
        %v503 = vmul.f32 %v499, %v312
        %504 = vst [vmem:[%s136] sm:$0xff] %v502
        %505 = vst [vmem:[%s136 + $0x8] sm:$0xff] %v503
        %s506 = sand.u32 %s71, 1
        %s507 = scalar_lea.sflag [#allocation3], %s506
        %s508 = sand.u32 %s71, 1
        %s509 = smul.addr %s508, 16
        %s510 = scalar_lea.vmem [#allocation2], %s509
        // Predicated region
        $region29: #{linear_attention.1} parent=27 // pred_check
          %p511 = pneg %p81
        $region30: #{linear_attention.1} parent=27 // pred_check_branch
          %513 = sbr.rel (%p511) target = $region32
        $region31: #{linear_attention.1} parent=27 // pred_region
          %s515 = ssub.s32 256, 256
          %516 = vsyncadd %s507, %s515
          %s517 = smul.addr %s16, 2
          %s518 = smul.addr %s517, 128
          %s519 = scalar_lea.hbm %s2, %s518
          %s520 = sshll.u32 %s510, 4
          %s521 = int_to_ptr.vmem [resolvable:$true] %s520
          %526 = dma.vmem_to_hbm [thread:$0]  %s521, 256, %s519, %s507, 128, 128, 8
        $region32: #{linear_attention.1} parent=27 // pred_fallthru
          _
      $region28: #{linear_attention.1} parent=5 // pred_fallthru
        _
      %p527 = scmp.le.s32.totalorder 2, %s11
      // Predicated region
      $region33: #{linear_attention.1} parent=5 // pred_check
        %p528 = pneg %p527
      $region34: #{linear_attention.1} parent=5 // pred_check_branch
        %530 = sbr.rel (%p528) target = $region36
      $region35: #{linear_attention.1} parent=5 // pred_region
        %s531 = ssub.s32 %s11, 2
        // Predicated region
        $region37: #{linear_attention.1} parent=35 // pred_check
          %p532 = pneg %p87
        $region38: #{linear_attention.1} parent=35 // pred_check_branch
          %534 = sbr.rel (%p532) target = $region40
        $region39: #{linear_attention.1} parent=35 // pred_region
          %s535 = sand.u32 %s72, 1
          %s536 = scalar_lea.sflag [#allocation3], %s535
          %s537 = sand.u32 %s72, 1
          %s538 = smul.addr %s537, 16
          %s539 = scalar_lea.vmem [#allocation2], %s538
          %540 = dma.done %s536, 256
        $region40: #{linear_attention.1} parent=35 // pred_fallthru
          _
      $region36: #{linear_attention.1} parent=5 // pred_fallthru
        _
    $region6: #{linear_attention.1} parent=1 // loop_footer
      %s15 = sadd.s32 1, %s11
    $region7: #{linear_attention.1} parent=1 // loop_footer_branch
      %10 = sbr.rel target = $region3
    $region8: #{linear_attention.1} parent=1 // loop_exit
      _
    %541 = vsyncpa [#allocation3], 1
    %s542 = scalar_lea.sflag [#allocation3], 1
    %543 = vsyncpa %s542, 1

</llo_original>
